<compile_context>
chip_gen: v7x
topology: tpu7x:2x2x1
jax: 0.10.0
libtpu: 0.0.40
codegen_flags: <defaults>
</compile_context>

<pallas_src>
import functools
import math

import jax
import jax.numpy as jnp
from jax.experimental import pallas as pl
from jax.experimental.pallas import tpu as pltpu


def _round_up(x, m):
    return (x + m - 1) // m * m


def _divisor_tile(d, cap, align):
    """Largest multiple of `align` that divides `d` and is <= cap (requires d % align == 0)."""
    if d <= cap:
        return d
    t = (cap // align) * align
    while t > align and d % t:
        t -= align
    return t


# ----------------------------------------------------------------------------
# Pallas tiled matmul:  a (M,K) or (G,M,K)  @  b (K,N) or (G,K,N)  ->  (G,M,N) f32
# 2-D operands are shared across the G axis (conv weights shared over batch / phases).
# Optional fused leaky-relu epilogue (slope float; 0.0 == ReLU).
# ----------------------------------------------------------------------------
def _mm_kernel(a_ref, b_ref, o_ref, acc_ref, *, act):
    @pl.when(pl.program_id(3) == 0)
    def _():
        acc_ref[...] = jnp.zeros_like(acc_ref)

    acc_ref[...] += jnp.dot(a_ref[...], b_ref[...],
                            preferred_element_type=jnp.float32)

    @pl.when(pl.program_id(3) == pl.num_programs(3) - 1)
    def _():
        y = acc_ref[...]
        if act is not None:
            y = jnp.where(y >= 0, y, y * act)
        o_ref[...] = y


@functools.lru_cache(maxsize=None)
def _mm_callable(G, M, K, N, a_batched, b_batched, tm, tk, tn, act):
    a_spec = (pl.BlockSpec((None, tm, tk), lambda g, i, j, k: (g, i, k))
              if a_batched else
              pl.BlockSpec((tm, tk), lambda g, i, j, k: (i, k)))
    b_spec = (pl.BlockSpec((None, tk, tn), lambda g, i, j, k: (g, k, j))
              if b_batched else
              pl.BlockSpec((tk, tn), lambda g, i, j, k: (k, j)))
    f = pl.pallas_call(
        functools.partial(_mm_kernel, act=act),
        out_shape=jax.ShapeDtypeStruct((G, M, N), jnp.float32),
        grid_spec=pltpu.PrefetchScalarGridSpec(
            num_scalar_prefetch=0,
            grid=(G, M // tm, N // tn, K // tk),
            in_specs=[a_spec, b_spec],
            out_specs=pl.BlockSpec((None, tm, tn), lambda g, i, j, k: (g, i, j)),
            scratch_shapes=[pltpu.VMEM((tm, tn), jnp.float32)],
        ),
        compiler_params=pltpu.CompilerParams(
            dimension_semantics=("parallel", "parallel", "parallel", "arbitrary"),
            vmem_limit_bytes=32 * 1024 * 1024),
    )
    return jax.jit(f)


def pallas_bmm(a, b, act=None):
    a_batched = a.ndim == 3
    b_batched = b.ndim == 3
    G = a.shape[0] if a_batched else (b.shape[0] if b_batched else 1)
    M, K = a.shape[-2], a.shape[-1]
    Kb, N = b.shape[-2], b.shape[-1]
    assert K == Kb, (a.shape, b.shape)

    # ---- shape-adaptive tiles: never pad K, pad M only to 8/tm, pad N only if needed.
    if K <= 2048 or K % 128 != 0:
        tk = K
    else:
        tk = _divisor_tile(K, 2048, 128)
    cap_m = max(8, min(512, ((2 << 20) // (2 * tk)) // 8 * 8))
    tm = min(cap_m, _round_up(M, 8))
    Mp = _round_up(M, tm)
    if N % 128 == 0:
        cap_n = max(128, min(2048,
                             ((4 << 20) // (2 * tk)) // 128 * 128,
                             ((2 << 20) // (4 * tm)) // 128 * 128))
        tn, Np = _divisor_tile(N, cap_n, 128), N
    elif N <= 256:
        tn, Np = N, N
    else:
        tn, Np = 128, _round_up(N, 128)

    a = a.astype(jnp.bfloat16)
    b = b.astype(jnp.bfloat16)
    if Mp != M:
        pad = [(0, 0)] * a.ndim
        pad[-2] = (0, Mp - M)
        a = jnp.pad(a, pad)
    if Np != N:
        pad = [(0, 0)] * b.ndim
        pad[-1] = (0, Np - N)
        b = jnp.pad(b, pad)
    act_key = None if act is None else float(act)
    out = _mm_callable(G, Mp, K, Np, a_batched, b_batched, tm, tk, tn, act_key)(a, b)
    if Mp != M or Np != N:
        out = out[:, :M, :N]
    return out


def pallas_matmul(a, b):
    """(M, K) @ (K, N) -> (M, N) float32."""
    return pallas_bmm(a, b)[0]


# ----------------------------------------------------------------------------
# Fused multi-head attention (scores + softmax + context in one Pallas kernel)
# ----------------------------------------------------------------------------
def _attn_kernel(q_ref, k_ref, v_ref, o_ref, *, scale):
    q = q_ref[...]
    k = k_ref[...]
    v = v_ref[...]
    s = jax.lax.dot_general(q, k, (((1,), (1,)), ((), ())),
                            preferred_element_type=jnp.float32) * scale
    m = jnp.max(s, axis=-1, keepdims=True)
    e = jnp.exp(s - m)
    p = e / jnp.sum(e, axis=-1, keepdims=True)
    o_ref[...] = jnp.dot(p, v, preferred_element_type=jnp.float32)


@functools.lru_cache(maxsize=None)
def _attn_callable(G, N, hd, tq, scale):
    f = pl.pallas_call(
        functools.partial(_attn_kernel, scale=scale),
        out_shape=jax.ShapeDtypeStruct((G, N, hd), jnp.float32),
        grid_spec=pltpu.PrefetchScalarGridSpec(
            num_scalar_prefetch=0,
            grid=(G, N // tq),
            in_specs=[pl.BlockSpec((None, tq, hd), lambda g, i: (g, i, 0)),
                      pl.BlockSpec((None, N, hd), lambda g, i: (g, 0, 0)),
                      pl.BlockSpec((None, N, hd), lambda g, i: (g, 0, 0))],
            out_specs=pl.BlockSpec((None, tq, hd), lambda g, i: (g, i, 0)),
        ),
        compiler_params=pltpu.CompilerParams(
            dimension_semantics=("parallel", "arbitrary"),
            vmem_limit_bytes=32 * 1024 * 1024),
    )
    return jax.jit(f)


# ----------------------------------------------------------------------------
# Fused InstanceNorm2d (affine=False) + LeakyReLU / ReLU
# ----------------------------------------------------------------------------
def _inorm_kernel(x_ref, o_ref, *, eps, slope):
    x = x_ref[...]
    mean = jnp.mean(x, axis=1, keepdims=True)
    var = jnp.mean(jnp.square(x - mean), axis=1, keepdims=True)
    y = (x - mean) * jax.lax.rsqrt(var + eps)
    o_ref[...] = jnp.where(y >= 0, y, y * slope)


@functools.lru_cache(maxsize=None)
def _inorm_callable(Rp, HW, rb, eps, slope):
    f = pl.pallas_call(
        functools.partial(_inorm_kernel, eps=eps, slope=slope),
        out_shape=jax.ShapeDtypeStruct((Rp, HW), jnp.float32),
        grid=(Rp // rb,),
        in_specs=[pl.BlockSpec((rb, HW), lambda i: (i, 0))],
        out_specs=pl.BlockSpec((rb, HW), lambda i: (i, 0)),
        compiler_params=pltpu.CompilerParams(
            dimension_semantics=("parallel",),
            vmem_limit_bytes=32 * 1024 * 1024),
    )
    return jax.jit(f)


def instance_norm_act(x, slope, eps=1e-5):
    B, C, H, W = x.shape
    R, HW = B * C, H * W
    rb = max(8, min(_round_up(R, 8), ((2 << 20) // (4 * HW)) // 8 * 8))
    Rp = _round_up(R, rb)
    xr = x.reshape(R, HW).astype(jnp.float32)
    if Rp != R:
        xr = jnp.pad(xr, ((0, Rp - R), (0, 0)))
    out = _inorm_callable(Rp, HW, rb, float(eps), float(slope))(xr)
    if Rp != R:
        out = out[:R]
    return out.reshape(B, C, H, W)


# ----------------------------------------------------------------------------
# Conv / conv-transpose / linear glue (im2col in XLA, matmul in Pallas)
# ----------------------------------------------------------------------------
def conv2d(x, w, stride=1, padding=0, bias=None, act=None):
    """NCHW conv via im2col + Pallas matmul, computed as W(O,K) @ cols(K, Ho*Wo)."""
    assert bias is None or act is None
    B, C, H, W = x.shape
    O, _, kh, kw = w.shape
    xp = x.astype(jnp.bfloat16)
    if padding:
        xp = jnp.pad(xp, ((0, 0), (0, 0), (padding, padding), (padding, padding)))
    Hp, Wp = xp.shape[2], xp.shape[3]
    Ho = (Hp - kh) // stride + 1
    Wo = (Wp - kw) // stride + 1
    cols = []
    for di in range(kh):
        for dj in range(kw):
            cols.append(xp[:, :, di:di + stride * Ho:stride,
                           dj:dj + stride * Wo:stride])
    cols = jnp.concatenate(cols, axis=1).reshape(B, kh * kw * C, Ho * Wo)
    wmat = w.transpose(0, 2, 3, 1).reshape(O, kh * kw * C).astype(jnp.bfloat16)
    y = pallas_bmm(wmat, cols, act=act)                 # (B, O, Ho*Wo), lane-dense HW
    if bias is not None:
        y = y + bias[None, :, None]
    return y.reshape(B, O, Ho, Wo)


def conv_transpose2d(x, w_t):
    """ConvTranspose2d(kernel=4, stride=2, padding=1, bias=False), NCHW.

    No input dilation / im2col:
      P[(ky,kx,o), i, j] = sum_c w_t[c, o, ky, kx] * x[c, i, j]   (one 1x1-conv matmul)
      out[o, 2i+ky-1, 2j+kx-1] += P[(ky,kx,o), i, j]              (overlap-add, in XLA)
    """
    B, C, H, W = x.shape
    Cin, O, kh, kw = w_t.shape
    assert Cin == C and kh == 4 and kw == 4
    wmat = w_t.transpose(2, 3, 1, 0).reshape(16 * O, C).astype(jnp.bfloat16)
    xcols = x.reshape(B, C, H * W).astype(jnp.bfloat16)
    p = pallas_bmm(wmat, xcols)                          # (B, 16*O, H*W) f32
    p = p.reshape(B, 4, 4, O, H, W)
    p = jnp.pad(p, ((0, 0), (0, 0), (0, 0), (0, 0), (1, 1), (1, 1)))
    # phase a (output row parity): (kernel row ky, input row offset di)
    taps = {0: ((1, 0), (3, -1)), 1: ((2, 0), (0, 1))}
    phases = []
    for a in (0, 1):
        row = []
        for b in (0, 1):
            acc = 0.0
            for ky, di in taps[a]:
                for kx, dj in taps[b]:
                    acc = acc + p[:, ky, kx, :,
                                  1 + di:1 + di + H, 1 + dj:1 + dj + W]
            row.append(acc)
        phases.append(row)
    top = jnp.stack([phases[0][0], phases[0][1]], axis=-1)   # (B, O, H, W, 2)
    bot = jnp.stack([phases[1][0], phases[1][1]], axis=-1)
    out = jnp.stack([top, bot], axis=3)                      # (B, O, H, 2, W, 2)
    return out.reshape(B, O, 2 * H, 2 * W)


def _phase_selection():
    # S[a, d, ky] = 1 iff, for nearest-2x-upsample output phase `a`, kernel row `ky`
    # reads the original (un-upsampled) feature row at offset (d - 1).
    s = [[[1, 1, 0, 0], [0, 0, 1, 1], [0, 0, 0, 0]],     # a = 0
         [[1, 0, 0, 0], [0, 1, 1, 0], [0, 0, 0, 1]]]     # a = 1
    return jnp.asarray(s, jnp.float32)


def final_block(x, p):
    """Upsample(x2, nearest) -> ZeroPad2d((1,0,1,0)) -> Conv2d(128, O, 4, padding=1) -> Tanh,
    collapsed onto the UN-upsampled input: one 4-phase 3x3 conv + pixel interleave."""
    B, C, H, W = x.shape
    w, bias = p["w"], p["b"]                              # (O, C, 4, 4), (O,)
    O = w.shape[0]
    S = _phase_selection()
    wc = jnp.einsum('apk,bql,ockl->abocpq', S, S, w)      # (2, 2, O, C, 3, 3)
    wc = wc.reshape(4 * O, C, 3, 3)
    y = conv2d(x, wc, stride=1, padding=1)                # (B, 4*O, H, W)
    y = y.reshape(B, 2, 2, O, H, W).transpose(0, 3, 4, 1, 5, 2)   # (B, O, H, a, W, b)
    y = y.reshape(B, O, 2 * H, 2 * W) + bias[None, :, None, None]
    return jnp.tanh(y)


def linear(x, p):
    sh = x.shape
    y = pallas_matmul(x.reshape(-1, sh[-1]), p["w"]) + p["b"][None, :]
    return y.reshape(sh[:-1] + (p["w"].shape[1],))


def layer_norm(x, w, b, eps=1e-5):
    mean = jnp.mean(x, axis=-1, keepdims=True)
    var = jnp.mean(jnp.square(x - mean), axis=-1, keepdims=True)
    return (x - mean) * jax.lax.rsqrt(var + eps) * w + b


# ----------------------------------------------------------------------------
# Module pieces
# ----------------------------------------------------------------------------
def unet_down(x, p, normalize=True):
    # TODO(synk): nn.Dropout layers run as eval-mode identity (RNG not reproducible).
    if normalize:
        y = conv2d(x, p["w"], stride=2, padding=1)
        return instance_norm_act(y, slope=0.2)           # InstanceNorm + LeakyReLU(0.2)
    return conv2d(x, p["w"], stride=2, padding=1, act=0.2)   # fused LeakyReLU epilogue


def unet_up(x, skip, p):
    y = conv_transpose2d(x, p["w"])
    y = instance_norm_act(y, slope=0.0)                   # InstanceNorm + ReLU
    return jnp.concatenate([y, skip.astype(y.dtype)], axis=1)


def attention(x, p, heads):
    B, N, C = x.shape
    hd = C // heads
    qkv = pallas_matmul(x.reshape(B * N, C), p["qkv_w"])          # (B*N, 3C)
    qkv = qkv.reshape(B, N, 3, heads, hd).transpose(2, 0, 3, 1, 4)
    q = qkv[0].reshape(B * heads, N, hd)
    k = qkv[1].reshape(B * heads, N, hd)
    v = qkv[2].reshape(B * heads, N, hd)
    scale = 1.0 / math.sqrt(C)                                    # TransGAN: 1/sqrt(dim)
    tq = min(N, 256)
    ctx = _attn_callable(B * heads, N, hd, tq, scale)(q, k, v)    # fused attention
    ctx = ctx.reshape(B, heads, N, hd).transpose(0, 2, 1, 3).reshape(B, N, C)
    out = pallas_matmul(ctx.reshape(B * N, C), p["proj_w"]) + p["proj_b"][None, :]
    return out.reshape(B, N, C)


def encoder_block(x, p, heads):
    x = x + attention(layer_norm(x, p["ln1_w"], p["ln1_b"]), p, heads)
    h = layer_norm(x, p["ln2_w"], p["ln2_b"])
    B, N, C = x.shape
    h = pallas_matmul(h.reshape(B * N, C), p["fc1_w"]) + p["fc1_b"][None, :]
    h = jax.nn.gelu(h, approximate=False)
    h = pallas_matmul(h, p["fc2_w"]) + p["fc2_b"][None, :]
    return x + h.reshape(B, N, C)


def upsampling_tokens(x, H, W):
    """TransGAN UpSampling: tokens -> image -> PixelShuffle(2) -> tokens."""
    B, N, C = x.shape
    img = x.transpose(0, 2, 1).reshape(B, C, H, W)
    img = img.reshape(B, C // 4, 2, 2, H, W)
    img = img.transpose(0, 1, 4, 2, 5, 3).reshape(B, C // 4, H * 2, W * 2)
    H, W = H * 2, W * 2
    return img.reshape(B, C // 4, H * W).transpose(0, 2, 1), H, W


def generator_unet(x, P):
    d1 = unet_down(x, P["down1"], normalize=False)
    d2 = unet_down(d1, P["down2"])
    d3 = unet_down(d2, P["down3"])
    d4 = unet_down(d3, P["down4"])
    d5 = unet_down(d4, P["down5"])
    d6 = unet_down(d5, P["down6"])
    d7 = unet_down(d6, P["down7"])
    d8 = unet_down(d7, P["down8"], normalize=False)
    u1 = unet_up(d8, d7, P["up1"])
    u2 = unet_up(u1, d6, P["up2"])
    u3 = unet_up(u2, d5, P["up3"])
    u4 = unet_up(u3, d4, P["up4"])
    u5 = unet_up(u4, d3, P["up5"])
    u6 = unet_up(u5, d2, P["up6"])
    u7 = unet_up(u6, d1, P["up7"])
    # final: Upsample(x2, nearest) -> ZeroPad2d((1,0,1,0)) -> Conv2d(128,1,4,pad=1) -> Tanh
    return final_block(u7, P["final"])


def trans_generator_unet_abb(x, P, *, initial_size=8, dim=384, heads=4):
    tmp_input = x
    t1 = unet_down(x, P["trans_down1"])
    t2 = unet_down(t1, P["trans_down2"])
    t3 = unet_down(t2, P["trans_down3"])
    B = x.shape[0]
    z = t3.reshape(B, 1, 3 * 32 * 32)
    z = linear(z, P["linear1"])
    z = linear(z, P["mlp"]).reshape(-1, initial_size ** 2, dim)
    z = z + P["pos1"]
    H = W = initial_size
    for blk in P["enc1"]:
        z = encoder_block(z, blk, heads)
    z, H, W = upsampling_tokens(z, H, W)
    z = z + P["pos2"]
    for blk in P["enc2"]:
        z = encoder_block(z, blk, heads)
    z, H, W = upsampling_tokens(z, H, W)
    z = z + P["pos3"]
    for blk in P["enc3"]:
        z = encoder_block(z, blk, heads)
    img = z.transpose(0, 2, 1).reshape(-1, dim // 16, H, W)
    img = conv2d(img, P["linear_conv"]["w"], stride=1, padding=0,
                 bias=P["linear_conv"]["b"])
    u = unet_up(img, t2, P["trans_up1"])
    u = unet_up(u, t1, P["trans_up2"])
    u = unet_up(u, tmp_input, P["trans_up3"])
    trans_out = conv2d(u, P["out_layer"]["w"], stride=1, padding=1,
                       bias=P["out_layer"]["b"])
    new_in = (trans_out + tmp_input) / 2
    out = generator_unet(new_in, P["unet"])
    new_in = (out + new_in) / 2
    return generator_unet(new_in, P["B2"])


# ----------------------------------------------------------------------------
# Deterministic synthetic parameter init (no checkpoints)
# ----------------------------------------------------------------------------
class KeyGen:
    def __init__(self, seed):
        self._key = jax.random.PRNGKey(seed)

    def __call__(self):
        self._key, sub = jax.random.split(self._key)
        return sub


def init_conv(kg, o, c, kh, kw):
    fan_in = c * kh * kw
    return {"w": jax.random.normal(kg(), (o, c, kh, kw), jnp.float32) / math.sqrt(fan_in)}


def init_conv_b(kg, o, c, kh, kw):
    p = init_conv(kg, o, c, kh, kw)
    p["b"] = jnp.zeros((o,), jnp.float32)
    return p


def init_convT(kg, cin, cout, kh, kw):
    fan = cin * kh * kw
    return {"w": jax.random.normal(kg(), (cin, cout, kh, kw), jnp.float32) / math.sqrt(fan)}


def init_linear(kg, i, o):
    # weights stored as (in, out) so no runtime transpose is needed
    return {"w": jax.random.normal(kg(), (i, o), jnp.float32) / math.sqrt(i),
            "b": jnp.zeros((o,), jnp.float32)}


def init_encoder_block(kg, dim, mlp_ratio=4):
    hidden = dim * mlp_ratio
    s = 1.0 / math.sqrt(dim)
    sh = 1.0 / math.sqrt(hidden)
    return {
        "ln1_w": jnp.ones((dim,), jnp.float32), "ln1_b": jnp.zeros((dim,), jnp.float32),
        "qkv_w": jax.random.normal(kg(), (dim, 3 * dim), jnp.float32) * s,
        "proj_w": jax.random.normal(kg(), (dim, dim), jnp.float32) * s,
        "proj_b": jnp.zeros((dim,), jnp.float32),
        "ln2_w": jnp.ones((dim,), jnp.float32), "ln2_b": jnp.zeros((dim,), jnp.float32),
        "fc1_w": jax.random.normal(kg(), (dim, hidden), jnp.float32) * s,
        "fc1_b": jnp.zeros((hidden,), jnp.float32),
        "fc2_w": jax.random.normal(kg(), (hidden, dim), jnp.float32) * sh,
        "fc2_b": jnp.zeros((dim,), jnp.float32),
    }


def init_generator_unet(kg, in_channels=1, out_channels=1):
    P = {}
    downs = [(in_channels, 64), (64, 128), (128, 256), (256, 512),
             (512, 512), (512, 512), (512, 512), (512, 512)]
    for i, (ci, co) in enumerate(downs, 1):
        P[f"down{i}"] = init_conv(kg, co, ci, 4, 4)
    ups = [(512, 512), (1024, 512), (1024, 512), (1024, 512),
           (1024, 256), (512, 128), (256, 64)]            # up8 exists in the module but is unused
    for i, (ci, co) in enumerate(ups, 1):
        P[f"up{i}"] = init_convT(kg, ci, co, 4, 4)
    P["final"] = init_conv_b(kg, out_channels, 128, 4, 4)
    return P


def init_params(seed=0, dim=384, initial_size=8, depth1=5, depth2=4, depth3=2,
                mlp_ratio=4):
    kg = KeyGen(seed)
    return {
        "trans_down1": init_conv(kg, 16, 1, 4, 4),
        "trans_down2": init_conv(kg, 16, 16, 4, 4),
        "trans_down3": init_conv(kg, 3, 16, 4, 4),
        "linear1": init_linear(kg, 3072, 1024),
        "mlp": init_linear(kg, 1024, initial_size ** 2 * dim),
        "pos1": jnp.zeros((1, initial_size ** 2, dim), jnp.float32),
        "pos2": jnp.zeros((1, (initial_size * 2) ** 2, dim // 4), jnp.float32),
        "pos3": jnp.zeros((1, (initial_size * 4) ** 2, dim // 16), jnp.float32),
        "enc1": [init_encoder_block(kg, dim, mlp_ratio) for _ in range(depth1)],
        "enc2": [init_encoder_block(kg, dim // 4, mlp_ratio) for _ in range(depth2)],
        "enc3": [init_encoder_block(kg, dim // 16, mlp_ratio) for _ in range(depth3)],
        "linear_conv": init_conv_b(kg, 3, dim // 16, 1, 1),
        "trans_up1": init_convT(kg, 3, 16, 4, 4),
        "trans_up2": init_convT(kg, 32, 16, 4, 4),
        "trans_up3": init_convT(kg, 32, 1, 4, 4),
        "out_layer": init_conv_b(kg, 1, 2, 3, 3),
        "unet": init_generator_unet(kg, 1, 1),
        "B2": init_generator_unet(kg, 1, 1),
    }


if __name__ == "__main__":
    params = init_params(seed=0)
    # The module's view(B, 1, 3*32*32), the fixed positional-embedding sizes and the
    # 8 stride-2 downsamples pin the input to (B, 1, 256, 256); batch=1 is the
    # smallest consistent configuration.
    x = jax.random.normal(jax.random.PRNGKey(0), (1, 1, 256, 256), jnp.float32)
    out = trans_generator_unet_abb(x, params)
    out = jax.block_until_ready(out)
    assert out.shape == (1, 1, 256, 256), out.shape
    assert bool(jnp.all(jnp.isfinite(out)))
    print("KERNEL_OK")
</pallas_src>

<mosaic_0001>
module attributes {stable_mosaic.version = 11 : i64} {
  func.func @_mm_kernel(%arg0: i32, %arg1: i32, %arg2: i32, %arg3: i32, %arg4: memref<16x16xbf16, #tpu.memory_space<vmem>>, %arg5: memref<1x16x2048xbf16, #tpu.memory_space<vmem>>, %arg6: memref<1x16x2048xf32, #tpu.memory_space<vmem>>, %arg7: memref<16x2048xf32, #tpu.memory_space<vmem>>) attributes {dimension_semantics = [#tpu.dimension_semantics<parallel>, #tpu.dimension_semantics<parallel>, #tpu.dimension_semantics<parallel>, #tpu.dimension_semantics<arbitrary>], iteration_bounds = array<i64: 1, 1, 8, 1>, scalar_prefetch = 0 : i64, scratch_operands = 1 : i64, tpu.core_type = #tpu.core_type<tc>, window_params = [{transform_indices = @transform_0, window_bounds = array<i64: 16, 16>}, {transform_indices = @transform_1, window_bounds = array<i64: 1, 16, 2048>}, {transform_indices = @transform_2, window_bounds = array<i64: 1, 16, 2048>}]} {
    %c0_i32 = arith.constant 0 : i32
    %0 = arith.cmpi eq, %arg3, %c0_i32 : i32
    %1 = arith.extui %0 : i1 to i32
    %c0_i32_0 = arith.constant 0 : i32
    %2 = arith.cmpi ne, %1, %c0_i32_0 : i32
    scf.if %2 {
      %cst_11 = arith.constant 0.000000e+00 : f32
      %13 = vector.broadcast %cst_11 : f32 to vector<16x2048xf32>
      %c0_12 = arith.constant 0 : index
      %c0_13 = arith.constant 0 : index
      %14 = vector.load %arg7[%c0_12, %c0_13] : memref<16x2048xf32, #tpu.memory_space<vmem>>, vector<16x2048xf32>
      tpu.vector_store %arg7[%c0_12, %c0_13], %13 {strides = array<i32>} : memref<16x2048xf32, #tpu.memory_space<vmem>>, vector<16x2048xf32>,
    } else {
    }
    %c0 = arith.constant 0 : index
    %c0_1 = arith.constant 0 : index
    %3 = vector.load %arg7[%c0, %c0_1] : memref<16x2048xf32, #tpu.memory_space<vmem>>, vector<16x2048xf32>
    %c0_2 = arith.constant 0 : index
    %c0_3 = arith.constant 0 : index
    %4 = vector.load %arg4[%c0_2, %c0_3] : memref<16x16xbf16, #tpu.memory_space<vmem>>, vector<16x16xbf16>
    %c0_4 = arith.constant 0 : index
    %c0_5 = arith.constant 0 : index
    %c0_6 = arith.constant 0 : index
    %5 = vector.load %arg5[%c0_4, %c0_5, %c0_6] : memref<1x16x2048xbf16, #tpu.memory_space<vmem>>, vector<1x16x2048xbf16>
    %6 = vector.shape_cast %5 : vector<1x16x2048xbf16> to vector<16x2048xbf16>
    %cst = arith.constant dense<0.000000e+00> : vector<16x2048xf32>
    %7 = tpu.matmul %4, %6, %cst {dimension_numbers = #tpu.dot_dimension_numbers<[1], [0], [0], [1], [0, 0, 1, 1], [], []>} : vector<16x16xbf16>, vector<16x2048xbf16>, vector<16x2048xf32> -> vector<16x2048xf32>
    %8 = arith.addf %3, %7 : vector<16x2048xf32>
    %c0_7 = arith.constant 0 : index
    %c0_8 = arith.constant 0 : index
    %9 = vector.load %arg7[%c0_7, %c0_8] : memref<16x2048xf32, #tpu.memory_space<vmem>>, vector<16x2048xf32>
    tpu.vector_store %arg7[%c0_7, %c0_8], %8 {strides = array<i32>} : memref<16x2048xf32, #tpu.memory_space<vmem>>, vector<16x2048xf32>,
    %c0_i32_9 = arith.constant 0 : i32
    %10 = arith.cmpi eq, %arg3, %c0_i32_9 : i32
    %11 = arith.extui %10 : i1 to i32
    %c0_i32_10 = arith.constant 0 : i32
    %12 = arith.cmpi ne, %11, %c0_i32_10 : i32
    scf.if %12 {
      %c0_11 = arith.constant 0 : index
      %c0_12 = arith.constant 0 : index
      %13 = vector.load %arg7[%c0_11, %c0_12] : memref<16x2048xf32, #tpu.memory_space<vmem>>, vector<16x2048xf32>
      %c0_13 = arith.constant 0 : index
      %c0_14 = arith.constant 0 : index
      %c0_15 = arith.constant 0 : index
      %14 = vector.load %arg6[%c0_13, %c0_14, %c0_15] : memref<1x16x2048xf32, #tpu.memory_space<vmem>>, vector<1x16x2048xf32>
      %15 = vector.shape_cast %14 : vector<1x16x2048xf32> to vector<16x2048xf32>
      %16 = vector.shape_cast %13 : vector<16x2048xf32> to vector<1x16x2048xf32>
      tpu.vector_store %arg6[%c0_13, %c0_14, %c0_15], %16 {strides = array<i32>} : memref<1x16x2048xf32, #tpu.memory_space<vmem>>, vector<1x16x2048xf32>,
    } else {
    }
    return
  }
  func.func @transform_0(%arg0: i32, %arg1: i32, %arg2: i32, %arg3: i32) -> (i32, i32) {
    %c0_i32 = arith.constant 0 : i32
    return %arg1, %arg3 : i32, i32
  }
  func.func @transform_1(%arg0: i32, %arg1: i32, %arg2: i32, %arg3: i32) -> (i32, i32, i32) {
    %c0_i32 = arith.constant 0 : i32
    return %arg0, %arg3, %arg2 : i32, i32, i32
  }
  func.func @transform_2(%arg0: i32, %arg1: i32, %arg2: i32, %arg3: i32) -> (i32, i32, i32) {
    %c0_i32 = arith.constant 0 : i32
    return %arg0, %arg1, %arg2 : i32, i32, i32
  }
}

</mosaic_0001>

<llo_original>
// kernel: tpu_custom_call.1
$region0: #{tpu_custom_call.1}
  #allocation0 [shape = 'u32[]', space=smem, size = 0x4, offset = 0x4, fixed_abs, tag = 'smem constant byte address 0x4 - core index']
  #allocation1 [shape = 'u32[144,128]{1,0:T(1,128)}', space=vmem, size = 0x12000, scoped, tag = 'internal scratch']
  #allocation2 [shape = 'f32[16,2048]{1,0:T(8,128)}', space=vmem, size = 0x20000, scoped, tag = 'scratch operand']
  %s0 = inlined_call_operand.hbm [shape: bf16[16,16], index: 0, kind: input, shape index: {}]
  %s1 = inlined_call_operand.hbm [shape: bf16[1,16,16384], index: 1, kind: input, shape index: {}]
  %s2 = inlined_call_operand.hbm [shape: f32[1,16,16384], index: 2, kind: output, shape index: {}]
  %s3 = sld [smem:[#allocation0]]
  $region57: #{tpu_custom_call.1} parent=0
    _
  %s5 = ssub.s32 1, %s3
  %s6 = scalar_select 0, %s5, %s3
  $region1: #{tpu_custom_call.1} parent=0
    #allocation3 [shape = 'u8[4096]{0}', space=vmem, size = 0x1000, scoped, tag = 'input window, operand 0, single buffered']
    #allocation4 [shape = 's32[2]{0}', space=sflag, size = 0x8, scoped, tag = 'scoped memory for tpu_custom_call.1']
    #allocation5 [shape = 's32[2]{0}', space=sflag, size = 0x8, scoped, tag = 'scoped memory for tpu_custom_call.1']
    #allocation6 [shape = 'u8[131072]{0}', space=vmem, size = 0x20000, scoped, tag = 'input window, operand 1']
    #allocation7 [shape = 's32[2]{0}', space=sflag, size = 0x8, scoped, tag = 'scoped memory for tpu_custom_call.1']
    #allocation8 [shape = 'u8[262144]{0}', space=vmem, size = 0x40000, scoped, tag = 'output window, operand 0']
    %7 = vsyncpa [#allocation4], 0
    %8 = vsyncpa [#allocation7], 0
    %s9 = scalar_lea.sflag [#allocation7], 1
    %10 = vsyncpa %s9, 0
    %11 = vsyncpa [#allocation5], 0
    %s12 = scalar_lea.sflag [#allocation5], 1
    %13 = vsyncpa %s12, 0
    loop: start=0, step=1, limit=10
    $region2: #{tpu_custom_call.1} parent=1 // loop_pre_header
      _
    $region3: #{tpu_custom_call.1} parent=1 // loop_header
      %s15 = sphi 0, %s19
      %p16 = scmp.ge.s32.totalorder %s15, 10
      %s22 = sphi 0, %s48
      %s23 = sphi 0, %s44
      %s24 = sphi 0, %s40
      %s25 = sphi 0, %s36
      %s26 = sphi 0, %s22
      %s27 = sphi 0, %s23
      %s28 = sphi 0, %s24
      %s29 = sphi 0, %s25
      %s30 = sphi 0, %s26
      %s31 = sphi 0, %s27
      %s32 = sphi 0, %s28
      %s33 = sphi 0, %s29
      %s53 = sphi 0, %s55
      %s56 = sphi 0, %s53
      %s57 = sphi 0, %s56
      %s73 = sphi 0, %s57
      %s83 = sphi 0, %s85
      %s86 = sphi 0, %s83
      %s87 = sphi 0, %s86
      %s103 = sphi 0, %s87
      %s113 = sphi 0, %s115
      %s116 = sphi 0, %s113
      %s117 = sphi 0, %s116
      %s133 = sphi 0, %s117
    $region4: #{tpu_custom_call.1} parent=1 // loop_header_branch
      %18 = sbr.rel (%p16) target = $region8
    $region5: #{tpu_custom_call.1} parent=1 // loop_body
      %s20 = ssub.s32 %s15, 1
      %s21 = ssub.s32 %s15, 2
      %s34 = sadd.s32 1, %s25
      %p35 = scmp.ge.s32.totalorder %s34, 1
      %s36 = scalar_select %p35, 0, %s34
      %s37 = sadd.s32 1, %s24
      %s38 = scalar_select %p35, %s37, %s24
      %p39 = scmp.ge.s32.totalorder %s38, 8
      %s40 = scalar_select %p39, 0, %s38
      %s41 = sadd.s32 1, %s23
      %s42 = scalar_select %p39, %s41, %s23
      %p43 = scmp.ge.s32.totalorder %s42, 1
      %s44 = scalar_select %p43, 0, %s42
      %s45 = sadd.s32 1, %s22
      %s46 = scalar_select %p43, %s45, %s22
      %p47 = scmp.ge.s32.totalorder %s46, 1
      %s48 = scalar_select %p47, 0, %s46
      %s49 = ssub.s32 %s23, %s44
      %s50 = ssub.s32 %s25, %s36
      %s51 = sor.u32 %s49, %s50
      %p52 = scmp.eq.s32.totalorder %s51, 0
      %s54 = sadd.s32 %s53, 1
      %s55 = scalar_select %p52, %s53, %s54
      %p58 = pneg %p52
      %p59 = scmp.eq.s32.totalorder %s15, 7
      %p60 = por %p58, %p59
      %p61 = scmp.ne.s32.totalorder %s53, %s56
      %p62 = scmp.eq.s32.totalorder %s15, 0
      %p63 = por %p61, %p62
      %p64 = scmp.ne.s32.totalorder %s53, %s56
      %p65 = scmp.eq.s32.totalorder %s20, 7
      %p66 = por %p64, %p65
      %p67 = scmp.ne.s32.totalorder %s56, %s57
      %p68 = scmp.eq.s32.totalorder %s20, 0
      %p69 = por %p67, %p68
      %p70 = scmp.ne.s32.totalorder %s56, %s57
      %p71 = scmp.eq.s32.totalorder %s21, 7
      %p72 = por %p70, %p71
      %p74 = scmp.ne.s32.totalorder %s57, %s73
      %p75 = scmp.eq.s32.totalorder %s21, 0
      %p76 = por %p74, %p75
      %s77 = ssub.s32 %s22, %s48
      %s78 = ssub.s32 %s25, %s36
      %s79 = sor.u32 %s77, %s78
      %s80 = ssub.s32 %s24, %s40
      %s81 = sor.u32 %s79, %s80
      %p82 = scmp.eq.s32.totalorder %s81, 0
      %s84 = sadd.s32 %s83, 1
      %s85 = scalar_select %p82, %s83, %s84
      %p88 = pneg %p82
      %p89 = scmp.eq.s32.totalorder %s15, 7
      %p90 = por %p88, %p89
      %p91 = scmp.ne.s32.totalorder %s83, %s86
      %p92 = scmp.eq.s32.totalorder %s15, 0
      %p93 = por %p91, %p92
      %p94 = scmp.ne.s32.totalorder %s83, %s86
      %p95 = scmp.eq.s32.totalorder %s20, 7
      %p96 = por %p94, %p95
      %p97 = scmp.ne.s32.totalorder %s86, %s87
      %p98 = scmp.eq.s32.totalorder %s20, 0
      %p99 = por %p97, %p98
      %p100 = scmp.ne.s32.totalorder %s86, %s87
      %p101 = scmp.eq.s32.totalorder %s21, 7
      %p102 = por %p100, %p101
      %p104 = scmp.ne.s32.totalorder %s87, %s103
      %p105 = scmp.eq.s32.totalorder %s21, 0
      %p106 = por %p104, %p105
      %s107 = ssub.s32 %s22, %s48
      %s108 = ssub.s32 %s23, %s44
      %s109 = sor.u32 %s107, %s108
      %s110 = ssub.s32 %s24, %s40
      %s111 = sor.u32 %s109, %s110
      %p112 = scmp.eq.s32.totalorder %s111, 0
      %s114 = sadd.s32 %s113, 1
      %s115 = scalar_select %p112, %s113, %s114
      %p118 = pneg %p112
      %p119 = scmp.eq.s32.totalorder %s15, 7
      %p120 = por %p118, %p119
      %p121 = scmp.ne.s32.totalorder %s113, %s116
      %p122 = scmp.eq.s32.totalorder %s15, 0
      %p123 = por %p121, %p122
      %p124 = scmp.ne.s32.totalorder %s113, %s116
      %p125 = scmp.eq.s32.totalorder %s20, 7
      %p126 = por %p124, %p125
      %p127 = scmp.ne.s32.totalorder %s116, %s117
      %p128 = scmp.eq.s32.totalorder %s20, 0
      %p129 = por %p127, %p128
      %p130 = scmp.ne.s32.totalorder %s116, %s117
      %p131 = scmp.eq.s32.totalorder %s21, 7
      %p132 = por %p130, %p131
      %p134 = scmp.ne.s32.totalorder %s117, %s133
      %p135 = scmp.eq.s32.totalorder %s21, 0
      %p136 = por %p134, %p135
      %p137 = scmp.le.s32.totalorder 1, %s15
      %p138 = scmp.lt.s32.totalorder %s15, 9
      %p139 = pnand %p137, %p138
      %p140 = pneg %p139
      // Predicated region
      $region9: #{tpu_custom_call.1} parent=5 // pred_check
        _
      $region10: #{tpu_custom_call.1} parent=5 // pred_check_branch
        %142 = sbr.rel (%p139) target = $region12
      $region11: #{tpu_custom_call.1} parent=5 // pred_region
        %s143 = ssub.s32 %s15, 1
        // Predicated region
        $region13: #{tpu_custom_call.1} parent=11 // pred_check
          %p144 = pneg %p69
        $region14: #{tpu_custom_call.1} parent=11 // pred_check_branch
          %146 = sbr.rel (%p144) target = $region16
        $region15: #{tpu_custom_call.1} parent=11 // pred_region
          %s147 = smul.u32 2, %s27
          %s149 = ssub.s32 128, 128
          %150 = vsyncadd [#allocation4], %s149
          %s151 = sadd.s32 %s29, %s147
          %s152 = smul.addr %s151, 64
          %s153 = scalar_lea.hbm %s0, %s152
          %s154 = sshll.u32 [#allocation3], 4
          %s155 = int_to_ptr.vmem [resolvable:$true] %s154
          %160 = dma.hbm_to_vmem [thread:$0]  %s153, 128, %s155, [#allocation4], 64, 64, 4
        $region16: #{tpu_custom_call.1} parent=11 // pred_fallthru
          _
      $region12: #{tpu_custom_call.1} parent=5 // pred_fallthru
        _
      %p161 = scmp.lt.s32.totalorder %s15, 8
      // Predicated region
      $region17: #{tpu_custom_call.1} parent=5 // pred_check
        %p162 = pneg %p161
      $region18: #{tpu_custom_call.1} parent=5 // pred_check_branch
        %164 = sbr.rel (%p162) target = $region20
      $region19: #{tpu_custom_call.1} parent=5 // pred_region
        // Predicated region
        $region21: #{tpu_custom_call.1} parent=19 // pred_check
          %p165 = pneg %p93
        $region22: #{tpu_custom_call.1} parent=19 // pred_check_branch
          %167 = sbr.rel (%p165) target = $region24
        $region23: #{tpu_custom_call.1} parent=19 // pred_region
          %s168 = sand.u32 %s83, 1
          %s169 = scalar_lea.sflag [#allocation7], %s168
          %s170 = sand.u32 %s83, 1
          %s171 = smul.addr %s170, 128
          %s172 = scalar_lea.vmem [#allocation6], %s171
          %s173 = smul.u32 2, %s25
          %s174 = smul.u32 16, %s24
          %s176 = ssub.s32 2048, 2048
          %177 = vsyncadd %s169, %s176
          %s178 = smul.addr %s173, 128
          %s179 = sadd.s32 %s174, %s178
          %s180 = smul.addr %s22, 256
          %s181 = sadd.s32 %s179, %s180
          %s182 = smul.addr %s181, 64
          %s183 = scalar_lea.hbm %s1, %s182
          %s184 = sshll.u32 %s172, 4
          %s185 = int_to_ptr.vmem [resolvable:$true] %s184
          %190 = dma.hbm_to_vmem [thread:$0]  %s183, 2048, %s185, %s169, 8192, 1024, 64
        $region24: #{tpu_custom_call.1} parent=19 // pred_fallthru
          _
      $region20: #{tpu_custom_call.1} parent=5 // pred_fallthru
        _
      %p191 = scmp.le.s32.totalorder 1, %s15
      %p192 = scmp.lt.s32.totalorder %s15, 9
      %p193 = pnand %p191, %p192
      %p194 = pneg %p193
      // Predicated region
      $region25: #{tpu_custom_call.1} parent=5 // pred_check
        _
      $region26: #{tpu_custom_call.1} parent=5 // pred_check_branch
        %196 = sbr.rel (%p193) target = $region28
      $region27: #{tpu_custom_call.1} parent=5 // pred_region
        %s197 = ssub.s32 %s15, 1
        // Predicated region
        $region29: #{tpu_custom_call.1} parent=27 // pred_check
          %p198 = pneg %p69
        $region30: #{tpu_custom_call.1} parent=27 // pred_check_branch
          %200 = sbr.rel (%p198) target = $region32
        $region31: #{tpu_custom_call.1} parent=27 // pred_region
          %201 = dma.done [#allocation4], 128
        $region32: #{tpu_custom_call.1} parent=27 // pred_fallthru
          _
        %s202 = sand.u32 %s86, 1
        %s203 = scalar_lea.sflag [#allocation7], %s202
        %s204 = sand.u32 %s86, 1
        %s205 = smul.addr %s204, 128
        %s206 = scalar_lea.vmem [#allocation6], %s205
        // Predicated region
        $region33: #{tpu_custom_call.1} parent=27 // pred_check
          %p207 = pneg %p99
        $region34: #{tpu_custom_call.1} parent=27 // pred_check_branch
          %209 = sbr.rel (%p207) target = $region36
        $region35: #{tpu_custom_call.1} parent=27 // pred_region
          %210 = dma.done %s203, 2048
        $region36: #{tpu_custom_call.1} parent=27 // pred_fallthru
          _
        %p211 = pneg %p69
        %p212 = pneg %p66
        %s213 = sand.u32 %s86, 1
        %s214 = scalar_lea.sflag [#allocation7], %s213
        %s215 = sand.u32 %s86, 1
        %s216 = smul.addr %s215, 128
        %s217 = scalar_lea.vmem [#allocation6], %s216
        %p218 = pneg %p99
        %p219 = pneg %p96
        %p220 = pneg %p129
        %p221 = pneg %p126
        %s222 = sand.u32 %s116, 1
        %s223 = scalar_lea.sflag [#allocation5], %s222
        %s224 = sand.u32 %s116, 1
        %s225 = smul.addr %s224, 256
        %s226 = scalar_lea.vmem [#allocation8], %s225
        %s227 = smul.u32 2, %s27
        %s228 = smul.u32 2, %s29
        %s229 = smul.u32 16, %s28
        %s230 = smul.u32 2, %s27
        %s231 = smul.u32 16, %s28
        %p233 = scmp.eq.s32.totalorder %s29, 0
        // Predicated region
        $region37: #{tpu_custom_call.1} parent=27 // pred_check
          %p234 = pneg %p233
        $region38: #{tpu_custom_call.1} parent=27 // pred_check_branch
          %236 = sbr.rel (%p234) target = $region40
        $region39: #{tpu_custom_call.1} parent=27 // pred_region
          %237 = vst [vmem:[#allocation2] sm:$0xff] 0.0
          %238 = vst [vmem:[#allocation2 + $0x8] sm:$0xff] 0.0
          %239 = vst [vmem:[#allocation2 + $0x10] sm:$0xff] 0.0
          %240 = vst [vmem:[#allocation2 + $0x18] sm:$0xff] 0.0
          %241 = vst [vmem:[#allocation2 + $0x20] sm:$0xff] 0.0
          %242 = vst [vmem:[#allocation2 + $0x28] sm:$0xff] 0.0
          %243 = vst [vmem:[#allocation2 + $0x30] sm:$0xff] 0.0
          %244 = vst [vmem:[#allocation2 + $0x38] sm:$0xff] 0.0
          %245 = vst [vmem:[#allocation2 + $0x40] sm:$0xff] 0.0
          %246 = vst [vmem:[#allocation2 + $0x48] sm:$0xff] 0.0
          %247 = vst [vmem:[#allocation2 + $0x50] sm:$0xff] 0.0
          %248 = vst [vmem:[#allocation2 + $0x58] sm:$0xff] 0.0
          %249 = vst [vmem:[#allocation2 + $0x60] sm:$0xff] 0.0
          %250 = vst [vmem:[#allocation2 + $0x68] sm:$0xff] 0.0
          %251 = vst [vmem:[#allocation2 + $0x70] sm:$0xff] 0.0
          %252 = vst [vmem:[#allocation2 + $0x78] sm:$0xff] 0.0
          %253 = vst [vmem:[#allocation2 + $0x80] sm:$0xff] 0.0
          %254 = vst [vmem:[#allocation2 + $0x88] sm:$0xff] 0.0
          %255 = vst [vmem:[#allocation2 + $0x90] sm:$0xff] 0.0
          %256 = vst [vmem:[#allocation2 + $0x98] sm:$0xff] 0.0
          %257 = vst [vmem:[#allocation2 + $0xa0] sm:$0xff] 0.0
          %258 = vst [vmem:[#allocation2 + $0xa8] sm:$0xff] 0.0
          %259 = vst [vmem:[#allocation2 + $0xb0] sm:$0xff] 0.0
          %260 = vst [vmem:[#allocation2 + $0xb8] sm:$0xff] 0.0
          %261 = vst [vmem:[#allocation2 + $0xc0] sm:$0xff] 0.0
          %262 = vst [vmem:[#allocation2 + $0xc8] sm:$0xff] 0.0
          %263 = vst [vmem:[#allocation2 + $0xd0] sm:$0xff] 0.0
          %264 = vst [vmem:[#allocation2 + $0xd8] sm:$0xff] 0.0
          %265 = vst [vmem:[#allocation2 + $0xe0] sm:$0xff] 0.0
          %266 = vst [vmem:[#allocation2 + $0xe8] sm:$0xff] 0.0
          %267 = vst [vmem:[#allocation2 + $0xf0] sm:$0xff] 0.0
          %268 = vst [vmem:[#allocation2 + $0xf8] sm:$0xff] 0.0
        $region40: #{tpu_custom_call.1} parent=27 // pred_fallthru
          _
        %v269 = vld [vmem:[#allocation2] sm:$0xff]
        %v270 = vld [vmem:[#allocation2 + $0x8] sm:$0xff]
        %v271 = vld [vmem:[#allocation2 + $0x10] sm:$0xff]
        %v272 = vld [vmem:[#allocation2 + $0x18] sm:$0xff]
        %v273 = vld [vmem:[#allocation2 + $0x20] sm:$0xff]
        %v274 = vld [vmem:[#allocation2 + $0x28] sm:$0xff]
        %v275 = vld [vmem:[#allocation2 + $0x30] sm:$0xff]
        %v276 = vld [vmem:[#allocation2 + $0x38] sm:$0xff]
        %v277 = vld [vmem:[#allocation2 + $0x40] sm:$0xff]
        %v278 = vld [vmem:[#allocation2 + $0x48] sm:$0xff]
        %v279 = vld [vmem:[#allocation2 + $0x50] sm:$0xff]
        %v280 = vld [vmem:[#allocation2 + $0x58] sm:$0xff]
        %v281 = vld [vmem:[#allocation2 + $0x60] sm:$0xff]
        %v282 = vld [vmem:[#allocation2 + $0x68] sm:$0xff]
        %v283 = vld [vmem:[#allocation2 + $0x70] sm:$0xff]
        %v284 = vld [vmem:[#allocation2 + $0x78] sm:$0xff]
        %v285 = vld [vmem:[#allocation2 + $0x80] sm:$0xff]
        %v286 = vld [vmem:[#allocation2 + $0x88] sm:$0xff]
        %v287 = vld [vmem:[#allocation2 + $0x90] sm:$0xff]
        %v288 = vld [vmem:[#allocation2 + $0x98] sm:$0xff]
        %v289 = vld [vmem:[#allocation2 + $0xa0] sm:$0xff]
        %v290 = vld [vmem:[#allocation2 + $0xa8] sm:$0xff]
        %v291 = vld [vmem:[#allocation2 + $0xb0] sm:$0xff]
        %v292 = vld [vmem:[#allocation2 + $0xb8] sm:$0xff]
        %v293 = vld [vmem:[#allocation2 + $0xc0] sm:$0xff]
        %v294 = vld [vmem:[#allocation2 + $0xc8] sm:$0xff]
        %v295 = vld [vmem:[#allocation2 + $0xd0] sm:$0xff]
        %v296 = vld [vmem:[#allocation2 + $0xd8] sm:$0xff]
        %v297 = vld [vmem:[#allocation2 + $0xe0] sm:$0xff]
        %v298 = vld [vmem:[#allocation2 + $0xe8] sm:$0xff]
        %v299 = vld [vmem:[#allocation2 + $0xf0] sm:$0xff]
        %v300 = vld [vmem:[#allocation2 + $0xf8] sm:$0xff]
        %v301 = vld [vmem:[#allocation3] sm:$0xf]
        %v302 = vld [vmem:[#allocation3 + $0x4] sm:$0xf]
        %v303 = vld [vmem:[%s206] sm:$0xff]
        %v304 = vld [vmem:[%s206 + $0x8] sm:$0xff]
        %v305 = vld [vmem:[%s206 + $0x10] sm:$0xff]
        %v306 = vld [vmem:[%s206 + $0x18] sm:$0xff]
        %v307 = vld [vmem:[%s206 + $0x20] sm:$0xff]
        %v308 = vld [vmem:[%s206 + $0x28] sm:$0xff]
        %v309 = vld [vmem:[%s206 + $0x30] sm:$0xff]
        %v310 = vld [vmem:[%s206 + $0x38] sm:$0xff]
        %v311 = vld [vmem:[%s206 + $0x40] sm:$0xff]
        %v312 = vld [vmem:[%s206 + $0x48] sm:$0xff]
        %v313 = vld [vmem:[%s206 + $0x50] sm:$0xff]
        %v314 = vld [vmem:[%s206 + $0x58] sm:$0xff]
        %v315 = vld [vmem:[%s206 + $0x60] sm:$0xff]
        %v316 = vld [vmem:[%s206 + $0x68] sm:$0xff]
        %v317 = vld [vmem:[%s206 + $0x70] sm:$0xff]
        %v318 = vld [vmem:[%s206 + $0x78] sm:$0xff]
        %v321 = vunpack.c.l.b16 %v301
        %v322 = vunpack.c.l.b16 %v302
        %v323 = vpack.c.b16 %v322, %v321
        %v340 = vunpack.c.l.b16 %v303
        %v341 = vunpack.c.h.b16 %v303
        %v342 = vunpack.c.l.b16 %v304
        %v343 = vunpack.c.h.b16 %v304
        %v344 = vunpack.c.l.b16 %v305
        %v345 = vunpack.c.h.b16 %v305
        %v346 = vunpack.c.l.b16 %v306
        %v347 = vunpack.c.h.b16 %v306
        %v348 = vunpack.c.l.b16 %v307
        %v349 = vunpack.c.h.b16 %v307
        %v350 = vunpack.c.l.b16 %v308
        %v351 = vunpack.c.h.b16 %v308
        %v352 = vunpack.c.l.b16 %v309
        %v353 = vunpack.c.h.b16 %v309
        %v354 = vunpack.c.l.b16 %v310
        %v355 = vunpack.c.h.b16 %v310
        %v356 = vunpack.c.l.b16 %v311
        %v357 = vunpack.c.h.b16 %v311
        %v358 = vunpack.c.l.b16 %v312
        %v359 = vunpack.c.h.b16 %v312
        %v360 = vunpack.c.l.b16 %v313
        %v361 = vunpack.c.h.b16 %v313
        %v362 = vunpack.c.l.b16 %v314
        %v363 = vunpack.c.h.b16 %v314
        %v364 = vunpack.c.l.b16 %v315
        %v365 = vunpack.c.h.b16 %v315
        %v366 = vunpack.c.l.b16 %v316
        %v367 = vunpack.c.h.b16 %v316
        %v368 = vunpack.c.l.b16 %v317
        %v369 = vunpack.c.h.b16 %v317
        %v370 = vunpack.c.l.b16 %v318
        %v371 = vunpack.c.h.b16 %v318
        %v372 = vpack.c.b16 %v356, %v340
        %v373 = vpack.c.b16 %v357, %v341
        %v374 = vpack.c.b16 %v358, %v342
        %v375 = vpack.c.b16 %v359, %v343
        %v376 = vpack.c.b16 %v360, %v344
        %v377 = vpack.c.b16 %v361, %v345
        %v378 = vpack.c.b16 %v362, %v346
        %v379 = vpack.c.b16 %v363, %v347
        %v380 = vpack.c.b16 %v364, %v348
        %v381 = vpack.c.b16 %v365, %v349
        %v382 = vpack.c.b16 %v366, %v350
        %v383 = vpack.c.b16 %v367, %v351
        %v384 = vpack.c.b16 %v368, %v352
        %v385 = vpack.c.b16 %v369, %v353
        %v386 = vpack.c.b16 %v370, %v354
        %v387 = vpack.c.b16 %v371, %v355
        %vm404 = vcmask 130048
        %v406 = vsel %vm404, %v323, 0
        %408 = vmatprep.subr.bf16.mxu0 %v373
        %409 = vmatpush1.bf16.msra.mxu0 %v372
        %410 = vmatprep.subr.bf16.mxu0 0
        %411 = vmatpush1.bf16.msra.mxu0 0
        %412 = vmatprep.subr.bf16.mxu0 0
        %413 = vmatpush1.bf16.msra.mxu0 0
        %414 = vmatprep.subr.bf16.mxu0 0
        %415 = vmatpush1.bf16.msra.mxu0 0
        %416 = vmatprep.subr.bf16.mxu0 0
        %417 = vmatpush1.bf16.msra.mxu0 0
        %418 = vmatprep.subr.bf16.mxu0 0
        %419 = vmatpush1.bf16.msra.mxu0 0
        %420 = vmatprep.subr.bf16.mxu0 0
        %421 = vmatpush1.bf16.msra.mxu0 0
        %422 = vmatprep.subr.bf16.mxu0 0
        %423 = vmatpush1.bf16.msra.mxu0 0
        %424 = vmatprep.subr.bf16.mxu0 0
        %425 = vmatpush1.bf16.msra.mxu0 0
        %426 = vmatprep.subr.bf16.mxu0 0
        %427 = vmatpush1.bf16.msra.mxu0 0
        %428 = vmatprep.subr.bf16.mxu0 0
        %429 = vmatpush1.bf16.msra.mxu0 0
        %430 = vmatprep.subr.bf16.mxu0 0
        %431 = vmatpush1.bf16.msra.mxu0 0
        %432 = vmatprep.subr.bf16.mxu0 0
        %433 = vmatpush1.bf16.msra.mxu0 0
        %434 = vmatprep.subr.bf16.mxu0 0
        %435 = vmatpush1.bf16.msra.mxu0 0
        %436 = vmatprep.subr.bf16.mxu0 0
        %437 = vmatpush1.bf16.msra.mxu0 0
        %438 = vmatprep.subr.bf16.mxu0 0
        %439 = vmatpush1.bf16.msra.mxu0 0
        %440 = vmatprep.mubr.bf16.mxu0 0
        %441 = vmatmul.mubr.bf16.gmra.mrb[0].mxu0 %v406
        %v442 = vpop.f32.mrb[0].mxu0
        %v443 = vadd.f32 0.0, %v442
        %v444 = vpop.f32.mrb[0].mxu0
        %v445 = vadd.f32 0.0, %v444
        %v446 = vpop.f32.mrb[0].mxu0
        %v447 = vadd.f32 0.0, %v446
        %v448 = vpop.f32.mrb[0].mxu0
        %v449 = vadd.f32 0.0, %v448
        %450 = vdwg.mxu0
        %451 = vmatprep.subr.bf16.mxu0 %v375
        %452 = vmatpush1.bf16.msra.mxu0 %v374
        %453 = vmatprep.subr.bf16.mxu0 0
        %454 = vmatpush1.bf16.msra.mxu0 0
        %455 = vmatprep.subr.bf16.mxu0 0
        %456 = vmatpush1.bf16.msra.mxu0 0
        %457 = vmatprep.subr.bf16.mxu0 0
        %458 = vmatpush1.bf16.msra.mxu0 0
        %459 = vmatprep.subr.bf16.mxu0 0
        %460 = vmatpush1.bf16.msra.mxu0 0
        %461 = vmatprep.subr.bf16.mxu0 0
        %462 = vmatpush1.bf16.msra.mxu0 0
        %463 = vmatprep.subr.bf16.mxu0 0
        %464 = vmatpush1.bf16.msra.mxu0 0
        %465 = vmatprep.subr.bf16.mxu0 0
        %466 = vmatpush1.bf16.msra.mxu0 0
        %467 = vmatprep.subr.bf16.mxu0 0
        %468 = vmatpush1.bf16.msra.mxu0 0
        %469 = vmatprep.subr.bf16.mxu0 0
        %470 = vmatpush1.bf16.msra.mxu0 0
        %471 = vmatprep.subr.bf16.mxu0 0
        %472 = vmatpush1.bf16.msra.mxu0 0
        %473 = vmatprep.subr.bf16.mxu0 0
        %474 = vmatpush1.bf16.msra.mxu0 0
        %475 = vmatprep.subr.bf16.mxu0 0
        %476 = vmatpush1.bf16.msra.mxu0 0
        %477 = vmatprep.subr.bf16.mxu0 0
        %478 = vmatpush1.bf16.msra.mxu0 0
        %479 = vmatprep.subr.bf16.mxu0 0
        %480 = vmatpush1.bf16.msra.mxu0 0
        %481 = vmatprep.subr.bf16.mxu0 0
        %482 = vmatpush1.bf16.msra.mxu0 0
        %483 = vmatprep.mubr.bf16.mxu0 0
        %484 = vmatmul.mubr.bf16.gmra.mrb[0].mxu0 %v406
        %v485 = vpop.f32.mrb[0].mxu0
        %v486 = vadd.f32 0.0, %v485
        %v487 = vpop.f32.mrb[0].mxu0
        %v488 = vadd.f32 0.0, %v487
        %v489 = vpop.f32.mrb[0].mxu0
        %v490 = vadd.f32 0.0, %v489
        %v491 = vpop.f32.mrb[0].mxu0
        %v492 = vadd.f32 0.0, %v491
        %493 = vdwg.mxu0
        %494 = vmatprep.subr.bf16.mxu0 %v377
        %495 = vmatpush1.bf16.msra.mxu0 %v376
        %496 = vmatprep.subr.bf16.mxu0 0
        %497 = vmatpush1.bf16.msra.mxu0 0
        %498 = vmatprep.subr.bf16.mxu0 0
        %499 = vmatpush1.bf16.msra.mxu0 0
        %500 = vmatprep.subr.bf16.mxu0 0
        %501 = vmatpush1.bf16.msra.mxu0 0
        %502 = vmatprep.subr.bf16.mxu0 0
        %503 = vmatpush1.bf16.msra.mxu0 0
        %504 = vmatprep.subr.bf16.mxu0 0
        %505 = vmatpush1.bf16.msra.mxu0 0
        %506 = vmatprep.subr.bf16.mxu0 0
        %507 = vmatpush1.bf16.msra.mxu0 0
        %508 = vmatprep.subr.bf16.mxu0 0
        %509 = vmatpush1.bf16.msra.mxu0 0
        %510 = vmatprep.subr.bf16.mxu0 0
        %511 = vmatpush1.bf16.msra.mxu0 0
        %512 = vmatprep.subr.bf16.mxu0 0
        %513 = vmatpush1.bf16.msra.mxu0 0
        %514 = vmatprep.subr.bf16.mxu0 0
        %515 = vmatpush1.bf16.msra.mxu0 0
        %516 = vmatprep.subr.bf16.mxu0 0
        %517 = vmatpush1.bf16.msra.mxu0 0
        %518 = vmatprep.subr.bf16.mxu0 0
        %519 = vmatpush1.bf16.msra.mxu0 0
        %520 = vmatprep.subr.bf16.mxu0 0
        %521 = vmatpush1.bf16.msra.mxu0 0
        %522 = vmatprep.subr.bf16.mxu0 0
        %523 = vmatpush1.bf16.msra.mxu0 0
        %524 = vmatprep.subr.bf16.mxu0 0
        %525 = vmatpush1.bf16.msra.mxu0 0
        %526 = vmatprep.mubr.bf16.mxu0 0
        %527 = vmatmul.mubr.bf16.gmra.mrb[0].mxu0 %v406
        %v528 = vpop.f32.mrb[0].mxu0
        %v529 = vadd.f32 0.0, %v528
        %v530 = vpop.f32.mrb[0].mxu0
        %v531 = vadd.f32 0.0, %v530
        %v532 = vpop.f32.mrb[0].mxu0
        %v533 = vadd.f32 0.0, %v532
        %v534 = vpop.f32.mrb[0].mxu0
        %v535 = vadd.f32 0.0, %v534
        %536 = vdwg.mxu0
        %537 = vmatprep.subr.bf16.mxu0 %v379
        %538 = vmatpush1.bf16.msra.mxu0 %v378
        %539 = vmatprep.subr.bf16.mxu0 0
        %540 = vmatpush1.bf16.msra.mxu0 0
        %541 = vmatprep.subr.bf16.mxu0 0
        %542 = vmatpush1.bf16.msra.mxu0 0
        %543 = vmatprep.subr.bf16.mxu0 0
        %544 = vmatpush1.bf16.msra.mxu0 0
        %545 = vmatprep.subr.bf16.mxu0 0
        %546 = vmatpush1.bf16.msra.mxu0 0
        %547 = vmatprep.subr.bf16.mxu0 0
        %548 = vmatpush1.bf16.msra.mxu0 0
        %549 = vmatprep.subr.bf16.mxu0 0
        %550 = vmatpush1.bf16.msra.mxu0 0
        %551 = vmatprep.subr.bf16.mxu0 0
        %552 = vmatpush1.bf16.msra.mxu0 0
        %553 = vmatprep.subr.bf16.mxu0 0
        %554 = vmatpush1.bf16.msra.mxu0 0
        %555 = vmatprep.subr.bf16.mxu0 0
        %556 = vmatpush1.bf16.msra.mxu0 0
        %557 = vmatprep.subr.bf16.mxu0 0
        %558 = vmatpush1.bf16.msra.mxu0 0
        %559 = vmatprep.subr.bf16.mxu0 0
        %560 = vmatpush1.bf16.msra.mxu0 0
        %561 = vmatprep.subr.bf16.mxu0 0
        %562 = vmatpush1.bf16.msra.mxu0 0
        %563 = vmatprep.subr.bf16.mxu0 0
        %564 = vmatpush1.bf16.msra.mxu0 0
        %565 = vmatprep.subr.bf16.mxu0 0
        %566 = vmatpush1.bf16.msra.mxu0 0
        %567 = vmatprep.subr.bf16.mxu0 0
        %568 = vmatpush1.bf16.msra.mxu0 0
        %569 = vmatprep.mubr.bf16.mxu0 0
        %570 = vmatmul.mubr.bf16.gmra.mrb[0].mxu0 %v406
        %v571 = vpop.f32.mrb[0].mxu0
        %v572 = vadd.f32 0.0, %v571
        %v573 = vpop.f32.mrb[0].mxu0
        %v574 = vadd.f32 0.0, %v573
        %v575 = vpop.f32.mrb[0].mxu0
        %v576 = vadd.f32 0.0, %v575
        %v577 = vpop.f32.mrb[0].mxu0
        %v578 = vadd.f32 0.0, %v577
        %579 = vdwg.mxu0
        %580 = vmatprep.subr.bf16.mxu0 %v381
        %581 = vmatpush1.bf16.msra.mxu0 %v380
        %582 = vmatprep.subr.bf16.mxu0 0
        %583 = vmatpush1.bf16.msra.mxu0 0
        %584 = vmatprep.subr.bf16.mxu0 0
        %585 = vmatpush1.bf16.msra.mxu0 0
        %586 = vmatprep.subr.bf16.mxu0 0
        %587 = vmatpush1.bf16.msra.mxu0 0
        %588 = vmatprep.subr.bf16.mxu0 0
        %589 = vmatpush1.bf16.msra.mxu0 0
        %590 = vmatprep.subr.bf16.mxu0 0
        %591 = vmatpush1.bf16.msra.mxu0 0
        %592 = vmatprep.subr.bf16.mxu0 0
        %593 = vmatpush1.bf16.msra.mxu0 0
        %594 = vmatprep.subr.bf16.mxu0 0
        %595 = vmatpush1.bf16.msra.mxu0 0
        %596 = vmatprep.subr.bf16.mxu0 0
        %597 = vmatpush1.bf16.msra.mxu0 0
        %598 = vmatprep.subr.bf16.mxu0 0
        %599 = vmatpush1.bf16.msra.mxu0 0
        %600 = vmatprep.subr.bf16.mxu0 0
        %601 = vmatpush1.bf16.msra.mxu0 0
        %602 = vmatprep.subr.bf16.mxu0 0
        %603 = vmatpush1.bf16.msra.mxu0 0
        %604 = vmatprep.subr.bf16.mxu0 0
        %605 = vmatpush1.bf16.msra.mxu0 0
        %606 = vmatprep.subr.bf16.mxu0 0
        %607 = vmatpush1.bf16.msra.mxu0 0
        %608 = vmatprep.subr.bf16.mxu0 0
        %609 = vmatpush1.bf16.msra.mxu0 0
        %610 = vmatprep.subr.bf16.mxu0 0
        %611 = vmatpush1.bf16.msra.mxu0 0
        %612 = vmatprep.mubr.bf16.mxu0 0
        %613 = vmatmul.mubr.bf16.gmra.mrb[0].mxu0 %v406
        %v614 = vpop.f32.mrb[0].mxu0
        %v615 = vadd.f32 0.0, %v614
        %v616 = vpop.f32.mrb[0].mxu0
        %v617 = vadd.f32 0.0, %v616
        %v618 = vpop.f32.mrb[0].mxu0
        %v619 = vadd.f32 0.0, %v618
        %v620 = vpop.f32.mrb[0].mxu0
        %v621 = vadd.f32 0.0, %v620
        %622 = vdwg.mxu0
        %623 = vmatprep.subr.bf16.mxu0 %v383
        %624 = vmatpush1.bf16.msra.mxu0 %v382
        %625 = vmatprep.subr.bf16.mxu0 0
        %626 = vmatpush1.bf16.msra.mxu0 0
        %627 = vmatprep.subr.bf16.mxu0 0
        %628 = vmatpush1.bf16.msra.mxu0 0
        %629 = vmatprep.subr.bf16.mxu0 0
        %630 = vmatpush1.bf16.msra.mxu0 0
        %631 = vmatprep.subr.bf16.mxu0 0
        %632 = vmatpush1.bf16.msra.mxu0 0
        %633 = vmatprep.subr.bf16.mxu0 0
        %634 = vmatpush1.bf16.msra.mxu0 0
        %635 = vmatprep.subr.bf16.mxu0 0
        %636 = vmatpush1.bf16.msra.mxu0 0
        %637 = vmatprep.subr.bf16.mxu0 0
        %638 = vmatpush1.bf16.msra.mxu0 0
        %639 = vmatprep.subr.bf16.mxu0 0
        %640 = vmatpush1.bf16.msra.mxu0 0
        %641 = vmatprep.subr.bf16.mxu0 0
        %642 = vmatpush1.bf16.msra.mxu0 0
        %643 = vmatprep.subr.bf16.mxu0 0
        %644 = vmatpush1.bf16.msra.mxu0 0
        %645 = vmatprep.subr.bf16.mxu0 0
        %646 = vmatpush1.bf16.msra.mxu0 0
        %647 = vmatprep.subr.bf16.mxu0 0
        %648 = vmatpush1.bf16.msra.mxu0 0
        %649 = vmatprep.subr.bf16.mxu0 0
        %650 = vmatpush1.bf16.msra.mxu0 0
        %651 = vmatprep.subr.bf16.mxu0 0
        %652 = vmatpush1.bf16.msra.mxu0 0
        %653 = vmatprep.subr.bf16.mxu0 0
        %654 = vmatpush1.bf16.msra.mxu0 0
        %655 = vmatprep.mubr.bf16.mxu0 0
        %656 = vmatmul.mubr.bf16.gmra.mrb[0].mxu0 %v406
        %v657 = vpop.f32.mrb[0].mxu0
        %v658 = vadd.f32 0.0, %v657
        %v659 = vpop.f32.mrb[0].mxu0
        %v660 = vadd.f32 0.0, %v659
        %v661 = vpop.f32.mrb[0].mxu0
        %v662 = vadd.f32 0.0, %v661
        %v663 = vpop.f32.mrb[0].mxu0
        %v664 = vadd.f32 0.0, %v663
        %665 = vdwg.mxu0
        %666 = vmatprep.subr.bf16.mxu0 %v385
        %667 = vmatpush1.bf16.msra.mxu0 %v384
        %668 = vmatprep.subr.bf16.mxu0 0
        %669 = vmatpush1.bf16.msra.mxu0 0
        %670 = vmatprep.subr.bf16.mxu0 0
        %671 = vmatpush1.bf16.msra.mxu0 0
        %672 = vmatprep.subr.bf16.mxu0 0
        %673 = vmatpush1.bf16.msra.mxu0 0
        %674 = vmatprep.subr.bf16.mxu0 0
        %675 = vmatpush1.bf16.msra.mxu0 0
        %676 = vmatprep.subr.bf16.mxu0 0
        %677 = vmatpush1.bf16.msra.mxu0 0
        %678 = vmatprep.subr.bf16.mxu0 0
        %679 = vmatpush1.bf16.msra.mxu0 0
        %680 = vmatprep.subr.bf16.mxu0 0
        %681 = vmatpush1.bf16.msra.mxu0 0
        %682 = vmatprep.subr.bf16.mxu0 0
        %683 = vmatpush1.bf16.msra.mxu0 0
        %684 = vmatprep.subr.bf16.mxu0 0
        %685 = vmatpush1.bf16.msra.mxu0 0
        %686 = vmatprep.subr.bf16.mxu0 0
        %687 = vmatpush1.bf16.msra.mxu0 0
        %688 = vmatprep.subr.bf16.mxu0 0
        %689 = vmatpush1.bf16.msra.mxu0 0
        %690 = vmatprep.subr.bf16.mxu0 0
        %691 = vmatpush1.bf16.msra.mxu0 0
        %692 = vmatprep.subr.bf16.mxu0 0
        %693 = vmatpush1.bf16.msra.mxu0 0
        %694 = vmatprep.subr.bf16.mxu0 0
        %695 = vmatpush1.bf16.msra.mxu0 0
        %696 = vmatprep.subr.bf16.mxu0 0
        %697 = vmatpush1.bf16.msra.mxu0 0
        %698 = vmatprep.mubr.bf16.mxu0 0
        %699 = vmatmul.mubr.bf16.gmra.mrb[0].mxu0 %v406
        %v700 = vpop.f32.mrb[0].mxu0
        %v701 = vadd.f32 0.0, %v700
        %v702 = vpop.f32.mrb[0].mxu0
        %v703 = vadd.f32 0.0, %v702
        %v704 = vpop.f32.mrb[0].mxu0
        %v705 = vadd.f32 0.0, %v704
        %v706 = vpop.f32.mrb[0].mxu0
        %v707 = vadd.f32 0.0, %v706
        %708 = vdwg.mxu0
        %709 = vmatprep.subr.bf16.mxu0 %v387
        %710 = vmatpush1.bf16.msra.mxu0 %v386
        %711 = vmatprep.subr.bf16.mxu0 0
        %712 = vmatpush1.bf16.msra.mxu0 0
        %713 = vmatprep.subr.bf16.mxu0 0
        %714 = vmatpush1.bf16.msra.mxu0 0
        %715 = vmatprep.subr.bf16.mxu0 0
        %716 = vmatpush1.bf16.msra.mxu0 0
        %717 = vmatprep.subr.bf16.mxu0 0
        %718 = vmatpush1.bf16.msra.mxu0 0
        %719 = vmatprep.subr.bf16.mxu0 0
        %720 = vmatpush1.bf16.msra.mxu0 0
        %721 = vmatprep.subr.bf16.mxu0 0
        %722 = vmatpush1.bf16.msra.mxu0 0
        %723 = vmatprep.subr.bf16.mxu0 0
        %724 = vmatpush1.bf16.msra.mxu0 0
        %725 = vmatprep.subr.bf16.mxu0 0
        %726 = vmatpush1.bf16.msra.mxu0 0
        %727 = vmatprep.subr.bf16.mxu0 0
        %728 = vmatpush1.bf16.msra.mxu0 0
        %729 = vmatprep.subr.bf16.mxu0 0
        %730 = vmatpush1.bf16.msra.mxu0 0
        %731 = vmatprep.subr.bf16.mxu0 0
        %732 = vmatpush1.bf16.msra.mxu0 0
        %733 = vmatprep.subr.bf16.mxu0 0
        %734 = vmatpush1.bf16.msra.mxu0 0
        %735 = vmatprep.subr.bf16.mxu0 0
        %736 = vmatpush1.bf16.msra.mxu0 0
        %737 = vmatprep.subr.bf16.mxu0 0
        %738 = vmatpush1.bf16.msra.mxu0 0
        %739 = vmatprep.subr.bf16.mxu0 0
        %740 = vmatpush1.bf16.msra.mxu0 0
        %741 = vmatprep.mubr.bf16.mxu0 0
        %742 = vmatmul.mubr.bf16.gmra.mrb[0].mxu0 %v406
        %v743 = vpop.f32.mrb[0].mxu0
        %v744 = vadd.f32 0.0, %v743
        %v745 = vpop.f32.mrb[0].mxu0
        %v746 = vadd.f32 0.0, %v745
        %v747 = vpop.f32.mrb[0].mxu0
        %v748 = vadd.f32 0.0, %v747
        %v749 = vpop.f32.mrb[0].mxu0
        %v750 = vadd.f32 0.0, %v749
        %751 = vdwg.mxu0
        %v752 = vadd.f32 %v269, %v443
        %v753 = vadd.f32 %v270, %v445
        %v754 = vadd.f32 %v271, %v486
        %v755 = vadd.f32 %v272, %v488
        %v756 = vadd.f32 %v273, %v529
        %v757 = vadd.f32 %v274, %v531
        %v758 = vadd.f32 %v275, %v572
        %v759 = vadd.f32 %v276, %v574
        %v760 = vadd.f32 %v277, %v615
        %v761 = vadd.f32 %v278, %v617
        %v762 = vadd.f32 %v279, %v658
        %v763 = vadd.f32 %v280, %v660
        %v764 = vadd.f32 %v281, %v701
        %v765 = vadd.f32 %v282, %v703
        %v766 = vadd.f32 %v283, %v744
        %v767 = vadd.f32 %v284, %v746
        %v768 = vadd.f32 %v285, %v447
        %v769 = vadd.f32 %v286, %v449
        %v770 = vadd.f32 %v287, %v490
        %v771 = vadd.f32 %v288, %v492
        %v772 = vadd.f32 %v289, %v533
        %v773 = vadd.f32 %v290, %v535
        %v774 = vadd.f32 %v291, %v576
        %v775 = vadd.f32 %v292, %v578
        %v776 = vadd.f32 %v293, %v619
        %v777 = vadd.f32 %v294, %v621
        %v778 = vadd.f32 %v295, %v662
        %v779 = vadd.f32 %v296, %v664
        %v780 = vadd.f32 %v297, %v705
        %v781 = vadd.f32 %v298, %v707
        %v782 = vadd.f32 %v299, %v748
        %v783 = vadd.f32 %v300, %v750
        %784 = vst [vmem:[#allocation2] sm:$0xff] %v752
        %785 = vst [vmem:[#allocation2 + $0x8] sm:$0xff] %v753
        %786 = vst [vmem:[#allocation2 + $0x10] sm:$0xff] %v754
        %787 = vst [vmem:[#allocation2 + $0x18] sm:$0xff] %v755
        %788 = vst [vmem:[#allocation2 + $0x20] sm:$0xff] %v756
        %789 = vst [vmem:[#allocation2 + $0x28] sm:$0xff] %v757
        %790 = vst [vmem:[#allocation2 + $0x30] sm:$0xff] %v758
        %791 = vst [vmem:[#allocation2 + $0x38] sm:$0xff] %v759
        %792 = vst [vmem:[#allocation2 + $0x40] sm:$0xff] %v760
        %793 = vst [vmem:[#allocation2 + $0x48] sm:$0xff] %v761
        %794 = vst [vmem:[#allocation2 + $0x50] sm:$0xff] %v762
        %795 = vst [vmem:[#allocation2 + $0x58] sm:$0xff] %v763
        %796 = vst [vmem:[#allocation2 + $0x60] sm:$0xff] %v764
        %797 = vst [vmem:[#allocation2 + $0x68] sm:$0xff] %v765
        %798 = vst [vmem:[#allocation2 + $0x70] sm:$0xff] %v766
        %799 = vst [vmem:[#allocation2 + $0x78] sm:$0xff] %v767
        %800 = vst [vmem:[#allocation2 + $0x80] sm:$0xff] %v768
        %801 = vst [vmem:[#allocation2 + $0x88] sm:$0xff] %v769
        %802 = vst [vmem:[#allocation2 + $0x90] sm:$0xff] %v770
        %803 = vst [vmem:[#allocation2 + $0x98] sm:$0xff] %v771
        %804 = vst [vmem:[#allocation2 + $0xa0] sm:$0xff] %v772
        %805 = vst [vmem:[#allocation2 + $0xa8] sm:$0xff] %v773
        %806 = vst [vmem:[#allocation2 + $0xb0] sm:$0xff] %v774
        %807 = vst [vmem:[#allocation2 + $0xb8] sm:$0xff] %v775
        %808 = vst [vmem:[#allocation2 + $0xc0] sm:$0xff] %v776
        %809 = vst [vmem:[#allocation2 + $0xc8] sm:$0xff] %v777
        %810 = vst [vmem:[#allocation2 + $0xd0] sm:$0xff] %v778
        %811 = vst [vmem:[#allocation2 + $0xd8] sm:$0xff] %v779
        %812 = vst [vmem:[#allocation2 + $0xe0] sm:$0xff] %v780
        %813 = vst [vmem:[#allocation2 + $0xe8] sm:$0xff] %v781
        %814 = vst [vmem:[#allocation2 + $0xf0] sm:$0xff] %v782
        %815 = vst [vmem:[#allocation2 + $0xf8] sm:$0xff] %v783
        // Predicated region
        $region41: #{tpu_custom_call.1} parent=27 // pred_check
          %p816 = pneg %p233
        $region42: #{tpu_custom_call.1} parent=27 // pred_check_branch
          %818 = sbr.rel (%p816) target = $region44
        $region43: #{tpu_custom_call.1} parent=27 // pred_region
          %v819 = vld [vmem:[#allocation2] sm:$0xff]
          %v820 = vld [vmem:[#allocation2 + $0x8] sm:$0xff]
          %v821 = vld [vmem:[#allocation2 + $0x10] sm:$0xff]
          %v822 = vld [vmem:[#allocation2 + $0x18] sm:$0xff]
          %v823 = vld [vmem:[#allocation2 + $0x20] sm:$0xff]
          %v824 = vld [vmem:[#allocation2 + $0x28] sm:$0xff]
          %v825 = vld [vmem:[#allocation2 + $0x30] sm:$0xff]
          %v826 = vld [vmem:[#allocation2 + $0x38] sm:$0xff]
          %v827 = vld [vmem:[#allocation2 + $0x40] sm:$0xff]
          %v828 = vld [vmem:[#allocation2 + $0x48] sm:$0xff]
          %v829 = vld [vmem:[#allocation2 + $0x50] sm:$0xff]
          %v830 = vld [vmem:[#allocation2 + $0x58] sm:$0xff]
          %v831 = vld [vmem:[#allocation2 + $0x60] sm:$0xff]
          %v832 = vld [vmem:[#allocation2 + $0x68] sm:$0xff]
          %v833 = vld [vmem:[#allocation2 + $0x70] sm:$0xff]
          %v834 = vld [vmem:[#allocation2 + $0x78] sm:$0xff]
          %v835 = vld [vmem:[#allocation2 + $0x80] sm:$0xff]
          %v836 = vld [vmem:[#allocation2 + $0x88] sm:$0xff]
          %v837 = vld [vmem:[#allocation2 + $0x90] sm:$0xff]
          %v838 = vld [vmem:[#allocation2 + $0x98] sm:$0xff]
          %v839 = vld [vmem:[#allocation2 + $0xa0] sm:$0xff]
          %v840 = vld [vmem:[#allocation2 + $0xa8] sm:$0xff]
          %v841 = vld [vmem:[#allocation2 + $0xb0] sm:$0xff]
          %v842 = vld [vmem:[#allocation2 + $0xb8] sm:$0xff]
          %v843 = vld [vmem:[#allocation2 + $0xc0] sm:$0xff]
          %v844 = vld [vmem:[#allocation2 + $0xc8] sm:$0xff]
          %v845 = vld [vmem:[#allocation2 + $0xd0] sm:$0xff]
          %v846 = vld [vmem:[#allocation2 + $0xd8] sm:$0xff]
          %v847 = vld [vmem:[#allocation2 + $0xe0] sm:$0xff]
          %v848 = vld [vmem:[#allocation2 + $0xe8] sm:$0xff]
          %v849 = vld [vmem:[#allocation2 + $0xf0] sm:$0xff]
          %v850 = vld [vmem:[#allocation2 + $0xf8] sm:$0xff]
          %851 = vst [vmem:[%s226] sm:$0xff] %v819
          %852 = vst [vmem:[%s226 + $0x8] sm:$0xff] %v820
          %853 = vst [vmem:[%s226 + $0x10] sm:$0xff] %v821
          %854 = vst [vmem:[%s226 + $0x18] sm:$0xff] %v822
          %855 = vst [vmem:[%s226 + $0x20] sm:$0xff] %v823
          %856 = vst [vmem:[%s226 + $0x28] sm:$0xff] %v824
          %857 = vst [vmem:[%s226 + $0x30] sm:$0xff] %v825
          %858 = vst [vmem:[%s226 + $0x38] sm:$0xff] %v826
          %859 = vst [vmem:[%s226 + $0x40] sm:$0xff] %v827
          %860 = vst [vmem:[%s226 + $0x48] sm:$0xff] %v828
          %861 = vst [vmem:[%s226 + $0x50] sm:$0xff] %v829
          %862 = vst [vmem:[%s226 + $0x58] sm:$0xff] %v830
          %863 = vst [vmem:[%s226 + $0x60] sm:$0xff] %v831
          %864 = vst [vmem:[%s226 + $0x68] sm:$0xff] %v832
          %865 = vst [vmem:[%s226 + $0x70] sm:$0xff] %v833
          %866 = vst [vmem:[%s226 + $0x78] sm:$0xff] %v834
          %867 = vst [vmem:[%s226 + $0x80] sm:$0xff] %v835
          %868 = vst [vmem:[%s226 + $0x88] sm:$0xff] %v836
          %869 = vst [vmem:[%s226 + $0x90] sm:$0xff] %v837
          %870 = vst [vmem:[%s226 + $0x98] sm:$0xff] %v838
          %871 = vst [vmem:[%s226 + $0xa0] sm:$0xff] %v839
          %872 = vst [vmem:[%s226 + $0xa8] sm:$0xff] %v840
          %873 = vst [vmem:[%s226 + $0xb0] sm:$0xff] %v841
          %874 = vst [vmem:[%s226 + $0xb8] sm:$0xff] %v842
          %875 = vst [vmem:[%s226 + $0xc0] sm:$0xff] %v843
          %876 = vst [vmem:[%s226 + $0xc8] sm:$0xff] %v844
          %877 = vst [vmem:[%s226 + $0xd0] sm:$0xff] %v845
          %878 = vst [vmem:[%s226 + $0xd8] sm:$0xff] %v846
          %879 = vst [vmem:[%s226 + $0xe0] sm:$0xff] %v847
          %880 = vst [vmem:[%s226 + $0xe8] sm:$0xff] %v848
          %881 = vst [vmem:[%s226 + $0xf0] sm:$0xff] %v849
          %882 = vst [vmem:[%s226 + $0xf8] sm:$0xff] %v850
        $region44: #{tpu_custom_call.1} parent=27 // pred_fallthru
          _
        %s883 = sand.u32 %s116, 1
        %s884 = scalar_lea.sflag [#allocation5], %s883
        %s885 = sand.u32 %s116, 1
        %s886 = smul.addr %s885, 256
        %s887 = scalar_lea.vmem [#allocation8], %s886
        // Predicated region
        $region45: #{tpu_custom_call.1} parent=27 // pred_check
          %p888 = pneg %p126
        $region46: #{tpu_custom_call.1} parent=27 // pred_check_branch
          %890 = sbr.rel (%p888) target = $region48
        $region47: #{tpu_custom_call.1} parent=27 // pred_region
          %s891 = smul.u32 2, %s27
          %s892 = smul.u32 16, %s28
          %s894 = ssub.s32 4096, 4096
          %895 = vsyncadd %s884, %s894
          %s896 = smul.addr %s891, 128
          %s897 = sadd.s32 %s892, %s896
          %s898 = smul.addr %s26, 256
          %s899 = sadd.s32 %s897, %s898
          %s900 = smul.addr %s899, 128
          %s901 = scalar_lea.hbm %s2, %s900
          %s902 = sshll.u32 %s887, 4
          %s903 = int_to_ptr.vmem [resolvable:$true] %s902
          %908 = dma.vmem_to_hbm [thread:$0]  %s903, 4096, %s901, %s884, 2048, 16384, 128
        $region48: #{tpu_custom_call.1} parent=27 // pred_fallthru
          _
      $region28: #{tpu_custom_call.1} parent=5 // pred_fallthru
        _
      %p909 = scmp.le.s32.totalorder 2, %s15
      // Predicated region
      $region49: #{tpu_custom_call.1} parent=5 // pred_check
        %p910 = pneg %p909
      $region50: #{tpu_custom_call.1} parent=5 // pred_check_branch
        %912 = sbr.rel (%p910) target = $region52
      $region51: #{tpu_custom_call.1} parent=5 // pred_region
        %s913 = ssub.s32 %s15, 2
        // Predicated region
        $region53: #{tpu_custom_call.1} parent=51 // pred_check
          %p914 = pneg %p132
        $region54: #{tpu_custom_call.1} parent=51 // pred_check_branch
          %916 = sbr.rel (%p914) target = $region56
        $region55: #{tpu_custom_call.1} parent=51 // pred_region
          %s917 = sand.u32 %s117, 1
          %s918 = scalar_lea.sflag [#allocation5], %s917
          %s919 = sand.u32 %s117, 1
          %s920 = smul.addr %s919, 256
          %s921 = scalar_lea.vmem [#allocation8], %s920
          %922 = dma.done %s918, 4096
        $region56: #{tpu_custom_call.1} parent=51 // pred_fallthru
          _
      $region52: #{tpu_custom_call.1} parent=5 // pred_fallthru
        _
    $region6: #{tpu_custom_call.1} parent=1 // loop_footer
      %s19 = sadd.s32 1, %s15
    $region7: #{tpu_custom_call.1} parent=1 // loop_footer_branch
      %14 = sbr.rel target = $region3
    $region8: #{tpu_custom_call.1} parent=1 // loop_exit
      _
    %923 = vsyncpa [#allocation4], 1
    %s924 = scalar_lea.sflag [#allocation4], 1
    %925 = vsyncpa %s924, 1
    %926 = vsyncpa [#allocation7], 1
    %s927 = scalar_lea.sflag [#allocation7], 1
    %928 = vsyncpa %s927, 1
    %929 = vsyncpa [#allocation5], 1
    %s930 = scalar_lea.sflag [#allocation5], 1
    %931 = vsyncpa %s930, 1

</llo_original>
